<compile_context>
chip_gen: v5e
topology: v5e:2x2
jax: 0.10.0
libtpu: 0.0.40
codegen_flags: <defaults>
</compile_context>

<pallas_src>
import jax
import jax.numpy as jnp
from jax.experimental import pallas as pl
from jax.experimental.pallas import tpu as pltpu

# --- Problem sizes (CartPole-style env: 4 states, 2 actions) ----------------
N_STATES = 4
N_ACTIONS = 2
H0 = 16
H1 = 32
BATCH = 32            # small demo batch (multiple of 8 -> zero batch padding)

PAD = 128             # lane-dense padded width for hidden / output layers
X_LANES = 8           # padded input width; lane N_STATES carries 1.0 (b0 fold)

# Packed parameter slab layout (rows x 128 lanes), bf16:
W1_OFF = 0                      # rows   0..127 : W1 (16x32 in top-left)
W2_OFF = PAD                    # rows 128..255 : W2 (32xN_ACTIONS in top-left)
L0_OFF = 2 * PAD                # rows 256..263 : W0 (4 rows) + b0 (row 260)
BR_OFF = 2 * PAD + X_LANES      # rows 264..271 : b1 (row 264), b2 (row 265)
P_ROWS = BR_OFF + 8             # 272 rows total (multiple of 8)


def _round_up(n, m):
    return ((n + m - 1) // m) * m


def net_kernel(x_ref, p_ref, o_ref):
    """One batch tile: 3 lane-dense matmuls + bias adds + 2 ReLUs, all in VMEM."""
    x = x_ref[...]                                    # (TILE_B, 8) bf16

    w0 = p_ref[L0_OFF:L0_OFF + X_LANES, :]            # (8, 128): W0 rows + b0 row
    w1 = p_ref[W1_OFF:W1_OFF + PAD, :]                # (128, 128)
    w2 = p_ref[W2_OFF:W2_OFF + PAD, :]                # (128, 128)
    b1 = p_ref[BR_OFF:BR_OFF + 1, :]                  # (1, 128)
    b2 = p_ref[BR_OFF + 1:BR_OFF + 2, :]              # (1, 128)

    # fc0 + ReLU (b0 folded into w0 via the constant-1.0 lane of x).
    h0 = jnp.dot(x, w0, preferred_element_type=jnp.float32)
    h0 = jnp.maximum(h0, 0.0).astype(jnp.bfloat16)    # (TILE_B, 128), lanes>=16 are 0

    # fc1 + ReLU
    h1 = jnp.dot(h0, w1, preferred_element_type=jnp.float32) + b1
    h1 = jnp.maximum(h1, 0.0).astype(jnp.bfloat16)    # (TILE_B, 128), lanes>=32 are 0

    # out
    out = jnp.dot(h1, w2, preferred_element_type=jnp.float32) + b2
    o_ref[...] = out.astype(o_ref.dtype)              # lane-dense (TILE_B, 128) store


def pack_params(w0, b0, w1, b1, w2, b2, dtype=jnp.bfloat16):
    """Pack all params into one zero-padded (272, 128) bf16 slab.

    Call ONCE per parameter update (hoisted out of the per-forward jit); built
    with pad + concatenate rather than chained .at[].set dynamic updates.
    """
    f32 = jnp.float32

    def block(a, rows):
        a = jnp.asarray(a, f32)
        return jnp.pad(a, ((0, rows - a.shape[0]), (0, PAD - a.shape[1])))

    w1_blk = block(w1, PAD)                                             # (128,128)
    w2_blk = block(w2, PAD)                                             # (128,128)
    l0 = jnp.concatenate(
        [jnp.asarray(w0, f32), jnp.asarray(b0, f32).reshape(1, -1)], axis=0)
    l0_blk = block(l0, X_LANES)                                         # (8,128)
    br_blk = jnp.concatenate(
        [block(jnp.asarray(b1, f32).reshape(1, -1), 1),
         block(jnp.asarray(b2, f32).reshape(1, -1), 1),
         jnp.zeros((6, PAD), f32)], axis=0)                             # (8,128)

    slab = jnp.concatenate([w1_blk, w2_blk, l0_blk, br_blk], axis=0)    # (272,128)
    return slab.astype(dtype)


def _prep_input(x, b_pad, dtype=jnp.bfloat16):
    """(B, N_STATES) -> (b_pad, 8): states | 1.0 (b0 fold) | zeros. Tiny op."""
    B, n_states = x.shape
    x8 = jnp.concatenate(
        [x.astype(jnp.float32),
         jnp.ones((B, 1), jnp.float32),
         jnp.zeros((B, X_LANES - n_states - 1), jnp.float32)], axis=1)
    if b_pad != B:
        x8 = jnp.pad(x8, ((0, b_pad - B), (0, 0)))
    return x8.astype(dtype)


def net_forward(x, packed_params, *, tile_b=None):
    """x: (B, N_STATES). Returns the padded (b_pad, 128) f32 Q-value slab.

    Rows >= B and lanes >= N_ACTIONS are padding; the hot RL loop should mask
    or fuse instead of slicing (slice only for checks / final readout).
    """
    B = x.shape[0]
    if tile_b is None:
        tile_b = min(_round_up(B, 8), 1024)       # single grid step by default
    else:
        tile_b = _round_up(max(8, min(tile_b, _round_up(B, 8))), 8)
    b_pad = _round_up(B, tile_b)
    n_tiles = b_pad // tile_b

    x8 = _prep_input(x, b_pad)

    return pl.pallas_call(
        net_kernel,
        out_shape=jax.ShapeDtypeStruct((b_pad, PAD), jnp.float32),
        grid=(n_tiles,),
        in_specs=[
            pl.BlockSpec((tile_b, X_LANES), lambda i: (i, 0)),   # batch tile
            pl.BlockSpec((P_ROWS, PAD), lambda i: (0, 0)),       # weights: resident
        ],
        out_specs=pl.BlockSpec((tile_b, PAD), lambda i: (i, 0)),
        compiler_params=pltpu.CompilerParams(
            dimension_semantics=("parallel",)),
    )(x8, packed_params)


def init_params(key):
    """Synthetic init mirroring the module: fc1/out weights ~ N(0, 0.1)."""
    k0, k1, k2, kb0, kb1, kb2 = jax.random.split(key, 6)
    # fc0: Linear(N_STATES, 16) default init (PyTorch stores (out,in); transpose)
    w0_t = jax.random.uniform(k0, (H0, N_STATES), jnp.float32, -0.5, 0.5)
    b0 = jax.random.uniform(kb0, (H0,), jnp.float32, -0.5, 0.5)
    # fc1: Linear(16, 32), weight ~ N(0, 0.1)
    w1_t = 0.1 * jax.random.normal(k1, (H1, H0), jnp.float32)
    b1 = jax.random.uniform(kb1, (H1,), jnp.float32, -0.25, 0.25)
    # out: Linear(32, N_ACTIONS), weight ~ N(0, 0.1)
    w2_t = 0.1 * jax.random.normal(k2, (N_ACTIONS, H1), jnp.float32)
    b2 = jax.random.uniform(kb2, (N_ACTIONS,), jnp.float32, -0.2, 0.2)
    return (w0_t.T, b0, w1_t.T, b1, w2_t.T, b2)


def reference_forward_bf16(x, w0, b0, w1, b1, w2, b2):
    """Pure-JAX reference mirroring the kernel's bf16 storage / f32 accumulation."""
    c = lambda a: jnp.asarray(a, jnp.float32).astype(jnp.bfloat16).astype(jnp.float32)
    x, w0, b0, w1, b1, w2, b2 = map(c, (x, w0, b0, w1, b1, w2, b2))
    h0 = c(jnp.maximum(x @ w0 + b0, 0.0))
    h1 = c(jnp.maximum(h0 @ w1 + b1, 0.0))
    return h1 @ w2 + b2


if __name__ == "__main__":
    key = jax.random.PRNGKey(0)
    kx, kp = jax.random.split(key)
    x = jax.random.normal(kx, (BATCH, N_STATES), jnp.float32)
    params = init_params(kp)

    packed = pack_params(*params)        # once per param update, outside the jit
    fwd = jax.jit(net_forward)
    q_pad = fwd(x, packed)               # jitted hot path: padded lane-dense slab
    jax.block_until_ready(q_pad)

    # Check-only slice + comparison against a bf16-faithful pure-JAX reference.
    b_pad = _round_up(BATCH, 8)
    assert q_pad.shape == (b_pad, PAD)
    q = q_pad[:BATCH, :N_ACTIONS]
    ref = reference_forward_bf16(x, *params)
    assert q.shape == (BATCH, N_ACTIONS)
    assert jnp.allclose(q, ref, atol=1e-2, rtol=1e-2), float(
        jnp.max(jnp.abs(q - ref)))

    print("KERNEL_OK")
</pallas_src>

<mosaic_0001>
module attributes {stable_mosaic.version = 11 : i64} {
  func.func @net_kernel(%arg0: i32, %arg1: memref<32x8xbf16, #tpu.memory_space<vmem>>, %arg2: memref<272x128xbf16, #tpu.memory_space<vmem>>, %arg3: memref<32x128xf32, #tpu.memory_space<vmem>>) attributes {dimension_semantics = [#tpu.dimension_semantics<parallel>], iteration_bounds = array<i64: 1>, scalar_prefetch = 0 : i64, scratch_operands = 0 : i64, tpu.core_type = #tpu.core_type<tc>, window_params = [{transform_indices = @transform_0, window_bounds = array<i64: 32, 8>}, {pipeline_mode = #tpu.pipeline_mode<synchronous>, transform_indices = @transform_1, window_bounds = array<i64: 272, 128>}, {transform_indices = @transform_2, window_bounds = array<i64: 32, 128>}]} {
    %c0 = arith.constant 0 : index
    %c0_0 = arith.constant 0 : index
    %0 = vector.load %arg1[%c0, %c0_0] : memref<32x8xbf16, #tpu.memory_space<vmem>>, vector<32x8xbf16>
    %c256 = arith.constant 256 : index
    %c0_1 = arith.constant 0 : index
    %1 = vector.load %arg2[%c256, %c0_1] : memref<272x128xbf16, #tpu.memory_space<vmem>>, vector<8x128xbf16>
    %c0_2 = arith.constant 0 : index
    %c0_3 = arith.constant 0 : index
    %2 = vector.load %arg2[%c0_2, %c0_3] : memref<272x128xbf16, #tpu.memory_space<vmem>>, vector<128x128xbf16>
    %c128 = arith.constant 128 : index
    %c0_4 = arith.constant 0 : index
    %3 = vector.load %arg2[%c128, %c0_4] : memref<272x128xbf16, #tpu.memory_space<vmem>>, vector<128x128xbf16>
    %c264 = arith.constant 264 : index
    %c0_5 = arith.constant 0 : index
    %4 = vector.load %arg2[%c264, %c0_5] : memref<272x128xbf16, #tpu.memory_space<vmem>>, vector<1x128xbf16>
    %c265 = arith.constant 265 : index
    %c0_6 = arith.constant 0 : index
    %5 = vector.load %arg2[%c265, %c0_6] : memref<272x128xbf16, #tpu.memory_space<vmem>>, vector<1x128xbf16>
    %cst = arith.constant dense<0.000000e+00> : vector<32x128xf32>
    %6 = tpu.matmul %0, %1, %cst {dimension_numbers = #tpu.dot_dimension_numbers<[1], [0], [0], [1], [0, 0, 1, 1], [], []>} : vector<32x8xbf16>, vector<8x128xbf16>, vector<32x128xf32> -> vector<32x128xf32>
    %cst_7 = arith.constant 0.000000e+00 : f32
    %7 = vector.broadcast %cst_7 : f32 to vector<32x128xf32>
    %8 = arith.maximumf %6, %7 : vector<32x128xf32>
    %9 = arith.truncf %8 : vector<32x128xf32> to vector<32x128xbf16>
    %cst_8 = arith.constant dense<0.000000e+00> : vector<32x128xf32>
    %10 = tpu.matmul %9, %2, %cst_8 {dimension_numbers = #tpu.dot_dimension_numbers<[1], [0], [0], [1], [0, 0, 1, 1], [], []>} : vector<32x128xbf16>, vector<128x128xbf16>, vector<32x128xf32> -> vector<32x128xf32>
    %11 = arith.extf %4 : vector<1x128xbf16> to vector<1x128xf32>
    %12 = vector.broadcast %11 : vector<1x128xf32> to vector<32x128xf32>
    %13 = arith.addf %10, %12 : vector<32x128xf32>
    %cst_9 = arith.constant 0.000000e+00 : f32
    %14 = vector.broadcast %cst_9 : f32 to vector<32x128xf32>
    %15 = arith.maximumf %13, %14 : vector<32x128xf32>
    %16 = arith.truncf %15 : vector<32x128xf32> to vector<32x128xbf16>
    %cst_10 = arith.constant dense<0.000000e+00> : vector<32x128xf32>
    %17 = tpu.matmul %16, %3, %cst_10 {dimension_numbers = #tpu.dot_dimension_numbers<[1], [0], [0], [1], [0, 0, 1, 1], [], []>} : vector<32x128xbf16>, vector<128x128xbf16>, vector<32x128xf32> -> vector<32x128xf32>
    %18 = arith.extf %5 : vector<1x128xbf16> to vector<1x128xf32>
    %19 = vector.broadcast %18 : vector<1x128xf32> to vector<32x128xf32>
    %20 = arith.addf %17, %19 : vector<32x128xf32>
    %c0_11 = arith.constant 0 : index
    %c0_12 = arith.constant 0 : index
    %21 = vector.load %arg3[%c0_11, %c0_12] : memref<32x128xf32, #tpu.memory_space<vmem>>, vector<32x128xf32>
    tpu.vector_store %arg3[%c0_11, %c0_12], %20 {strides = array<i32>} : memref<32x128xf32, #tpu.memory_space<vmem>>, vector<32x128xf32>,
    return
  }
  func.func @transform_0(%arg0: i32) -> (i32, i32) {
    %c0_i32 = arith.constant 0 : i32
    %c0_i32_0 = arith.constant 0 : i32
    return %arg0, %c0_i32 : i32, i32
  }
  func.func @transform_1(%arg0: i32) -> (i32, i32) {
    %c0_i32 = arith.constant 0 : i32
    %c0_i32_0 = arith.constant 0 : i32
    %c0_i32_1 = arith.constant 0 : i32
    return %c0_i32, %c0_i32_0 : i32, i32
  }
  func.func @transform_2(%arg0: i32) -> (i32, i32) {
    %c0_i32 = arith.constant 0 : i32
    %c0_i32_0 = arith.constant 0 : i32
    return %arg0, %c0_i32 : i32, i32
  }
}

</mosaic_0001>

<llo_original>
// kernel: net_forward.1
$region0: #{net_forward.1}
  #allocation0 [shape = 'u32[]', space=smem, size = 0x4, offset = 0x4, fixed_abs, tag = 'smem constant byte address 0x4 - core index']
  #allocation1 [shape = 'u32[72,128]{1,0:T(1,128)}', space=vmem, size = 0x9000, scoped, tag = 'internal scratch']
  %s0 = inlined_call_operand.vmem [shape: bf16[32,8], index: 0, kind: input, shape index: {}]
  %s1 = inlined_call_operand.hbm [shape: bf16[272,128], index: 1, kind: input, shape index: {}]
  %s2 = inlined_call_operand.hbm [shape: f32[32,128], index: 2, kind: output, shape index: {}]
  %s3 = sld [smem:[#allocation0]]
  $region22: #{net_forward.1} parent=0
    _
  %s5 = ssub.s32 1, %s3
  %s6 = scalar_select 0, %s5, %s3
  $region1: #{net_forward.1} parent=0
    #allocation2 [shape = 'u8[69632]{0}', space=vmem, size = 0x11000, scoped, tag = 'input window, operand 1, single buffered']
    #allocation3 [shape = 's32[1]{0}', space=sflag, size = 0x4, scoped, tag = 'scoped memory for net_forward.1']
    #allocation4 [shape = 's32[1]{0}', space=sflag, size = 0x4, scoped, tag = 'scoped memory for net_forward.1']
    #allocation5 [shape = 'u8[16384]{0}', space=vmem, size = 0x4000, scoped, tag = 'output window, operand 0, single buffered']
    %7 = vsyncpa [#allocation3], 0
    %8 = vsyncpa [#allocation4], 0
    // Predicated region
    $region2: #{net_forward.1} parent=1 // pred_check
      _
    $region3: #{net_forward.1} parent=1 // pred_check_branch
      %10 = sbr.rel (0) target = $region5
    $region4: #{net_forward.1} parent=1 // pred_region
      _
    $region5: #{net_forward.1} parent=1 // pred_fallthru
      _
    // Predicated region
    $region6: #{net_forward.1} parent=1 // pred_check
      _
    $region7: #{net_forward.1} parent=1 // pred_check_branch
      %12 = sbr.rel (0) target = $region9
    $region8: #{net_forward.1} parent=1 // pred_region
      %14 = vsyncadd [#allocation3], 0
      %s15 = sshll.u32 %s1, 4
      %s16 = int_to_ptr.hbm [resolvable:$true] %s15
      %s17 = sshll.u32 [#allocation2], 4
      %s18 = int_to_ptr.vmem [resolvable:$true] %s17
      %23 = dma.hbm_to_vmem [thread:$0]  %s16, 2176, %s18, [#allocation3], 64, 64, 4
    $region9: #{net_forward.1} parent=1 // pred_fallthru
      _
    // Predicated region
    $region10: #{net_forward.1} parent=1 // pred_check
      _
    $region11: #{net_forward.1} parent=1 // pred_check_branch
      %25 = sbr.rel (0) target = $region13
    $region12: #{net_forward.1} parent=1 // pred_region
      %27 = dma.done [#allocation3], 2176
    $region13: #{net_forward.1} parent=1 // pred_fallthru
      _
    %v29 = vld [vmem:[%s0] sm:$0xf]
    %v30 = vld [vmem:[%s0 + $0x4] sm:$0xf]
    %v31 = vld [vmem:[%s0 + $0x8] sm:$0xf]
    %v32 = vld [vmem:[%s0 + $0xc] sm:$0xf]
    %v33 = vld [vmem:[#allocation2 + $0x80] sm:$0xf]
    %v34 = vld [vmem:[#allocation2] sm:$0xf]
    %v35 = vld [vmem:[#allocation2 + $0x4] sm:$0xf]
    %v36 = vld [vmem:[#allocation2 + $0x8] sm:$0xf]
    %v37 = vld [vmem:[#allocation2 + $0xc] sm:$0xf]
    %v38 = vld [vmem:[#allocation2 + $0x10] sm:$0xf]
    %v39 = vld [vmem:[#allocation2 + $0x14] sm:$0xf]
    %v40 = vld [vmem:[#allocation2 + $0x18] sm:$0xf]
    %v41 = vld [vmem:[#allocation2 + $0x1c] sm:$0xf]
    %v42 = vld [vmem:[#allocation2 + $0x20] sm:$0xf]
    %v43 = vld [vmem:[#allocation2 + $0x24] sm:$0xf]
    %v44 = vld [vmem:[#allocation2 + $0x28] sm:$0xf]
    %v45 = vld [vmem:[#allocation2 + $0x2c] sm:$0xf]
    %v46 = vld [vmem:[#allocation2 + $0x30] sm:$0xf]
    %v47 = vld [vmem:[#allocation2 + $0x34] sm:$0xf]
    %v48 = vld [vmem:[#allocation2 + $0x38] sm:$0xf]
    %v49 = vld [vmem:[#allocation2 + $0x3c] sm:$0xf]
    %v50 = vld [vmem:[#allocation2 + $0x40] sm:$0xf]
    %v51 = vld [vmem:[#allocation2 + $0x44] sm:$0xf]
    %v52 = vld [vmem:[#allocation2 + $0x48] sm:$0xf]
    %v53 = vld [vmem:[#allocation2 + $0x4c] sm:$0xf]
    %v54 = vld [vmem:[#allocation2 + $0x50] sm:$0xf]
    %v55 = vld [vmem:[#allocation2 + $0x54] sm:$0xf]
    %v56 = vld [vmem:[#allocation2 + $0x58] sm:$0xf]
    %v57 = vld [vmem:[#allocation2 + $0x5c] sm:$0xf]
    %v58 = vld [vmem:[#allocation2 + $0x60] sm:$0xf]
    %v59 = vld [vmem:[#allocation2 + $0x64] sm:$0xf]
    %v60 = vld [vmem:[#allocation2 + $0x68] sm:$0xf]
    %v61 = vld [vmem:[#allocation2 + $0x6c] sm:$0xf]
    %v62 = vld [vmem:[#allocation2 + $0x70] sm:$0xf]
    %v63 = vld [vmem:[#allocation2 + $0x74] sm:$0xf]
    %v64 = vld [vmem:[#allocation2 + $0x78] sm:$0xf]
    %v65 = vld [vmem:[#allocation2 + $0x7c] sm:$0xf]
    %v66 = vld [vmem:[#allocation2 + $0x84] sm:$0x1]
    %v71 = vunpack.c.l.b16 %v29
    %v72 = vunpack.c.l.b16 %v30
    %v73 = vunpack.c.l.b16 %v31
    %v74 = vunpack.c.l.b16 %v32
    %v75 = vpack.c.b16 %v72, %v71
    %v76 = vpack.c.b16 %v74, %v73
    %vm77 = vcmask 64512
    %v79 = vsel %vm77, %v75, 0
    %v82 = vsel %vm77, %v76, 0
    %vm84 = vcmask 1043456
    %v86 = vsel %vm84, %v33, 0
    %88 = vmatpush.bf16.msra.mxu0 0
    %89 = vmatpush.bf16.msra.mxu0 0
    %90 = vmatpush.bf16.msra.mxu0 0
    %91 = vmatpush.bf16.msra.mxu0 0
    %92 = vmatpush.bf16.msra.mxu0 0
    %93 = vmatpush.bf16.msra.mxu0 0
    %94 = vmatpush.bf16.msra.mxu0 0
    %95 = vmatpush.bf16.msra.mxu0 %v86
    %96 = vmatmul.bf16.gmra.mxu0 %v79
    %v97 = vpop.f32.mrf.mxu0
    %v98 = vadd.f32 0.0, %v97
    %v99 = vpop.f32.mrf.mxu0
    %v100 = vadd.f32 0.0, %v99
    %101 = vmatmul.bf16.gmra.mxu0 %v82
    %v102 = vpop.f32.mrf.mxu0
    %v103 = vadd.f32 0.0, %v102
    %v104 = vpop.f32.mrf.mxu0
    %v105 = vadd.f32 0.0, %v104
    %106 = vdwg.mxu0
    %v107 = vmax.f32 %v98, 0.0
    %v108 = vmax.f32 %v100, 0.0
    %v109 = vmax.f32 %v103, 0.0
    %v110 = vmax.f32 %v105, 0.0
    %v111 = vpack.c.bf16 %v108, %v107
    %v112 = vpack.c.bf16 %v110, %v109
    %v113 = vunpack.c.l.bf16 %v66
    %v114 = vperm.slane %v113, 0
    %v131 = vunpack.c.l.b16 %v34
    %v132 = vunpack.c.l.b16 %v35
    %v133 = vunpack.c.l.b16 %v36
    %v134 = vunpack.c.l.b16 %v37
    %v135 = vunpack.c.l.b16 %v38
    %v136 = vunpack.c.l.b16 %v39
    %v137 = vunpack.c.l.b16 %v40
    %v138 = vunpack.c.l.b16 %v41
    %v139 = vunpack.c.l.b16 %v42
    %v140 = vunpack.c.l.b16 %v43
    %v141 = vunpack.c.l.b16 %v44
    %v142 = vunpack.c.l.b16 %v45
    %v143 = vunpack.c.l.b16 %v46
    %v144 = vunpack.c.l.b16 %v47
    %v145 = vunpack.c.l.b16 %v48
    %v146 = vunpack.c.l.b16 %v49
    %v147 = vpack.c.b16 %v132, %v131
    %v148 = vpack.c.b16 %v134, %v133
    %v149 = vpack.c.b16 %v136, %v135
    %v150 = vpack.c.b16 %v138, %v137
    %v151 = vpack.c.b16 %v140, %v139
    %v152 = vpack.c.b16 %v142, %v141
    %v153 = vpack.c.b16 %v144, %v143
    %v154 = vpack.c.b16 %v146, %v145
    %163 = vmatpush.bf16.msra.mxu0 %v154
    %164 = vmatpush.bf16.msra.mxu0 %v153
    %165 = vmatpush.bf16.msra.mxu0 %v152
    %166 = vmatpush.bf16.msra.mxu0 %v151
    %167 = vmatpush.bf16.msra.mxu0 %v150
    %168 = vmatpush.bf16.msra.mxu0 %v149
    %169 = vmatpush.bf16.msra.mxu0 %v148
    %170 = vmatpush.bf16.msra.mxu0 %v147
    %171 = vmatmul.bf16.gmra.mxu0 %v111
    %v172 = vpop.f32.mrf.mxu0
    %v173 = vadd.f32 %v114, %v172
    %v174 = vpop.f32.mrf.mxu0
    %v175 = vadd.f32 %v114, %v174
    %176 = vmatmul.bf16.gmra.mxu0 %v112
    %v177 = vpop.f32.mrf.mxu0
    %v178 = vadd.f32 %v114, %v177
    %v179 = vpop.f32.mrf.mxu0
    %v180 = vadd.f32 %v114, %v179
    %181 = vdwg.mxu0
    %v182 = vmax.f32 %v173, 0.0
    %v183 = vmax.f32 %v175, 0.0
    %v184 = vmax.f32 %v178, 0.0
    %v185 = vmax.f32 %v180, 0.0
    %v186 = vpack.c.bf16 %v183, %v182
    %v187 = vpack.c.bf16 %v185, %v184
    %v188 = vperm.slane %v113, 1
    %v205 = vunpack.c.l.b16 %v50
    %v206 = vunpack.c.l.b16 %v51
    %v207 = vunpack.c.l.b16 %v52
    %v208 = vunpack.c.l.b16 %v53
    %v209 = vunpack.c.l.b16 %v54
    %v210 = vunpack.c.l.b16 %v55
    %v211 = vunpack.c.l.b16 %v56
    %v212 = vunpack.c.l.b16 %v57
    %v213 = vunpack.c.l.b16 %v58
    %v214 = vunpack.c.l.b16 %v59
    %v215 = vunpack.c.l.b16 %v60
    %v216 = vunpack.c.l.b16 %v61
    %v217 = vunpack.c.l.b16 %v62
    %v218 = vunpack.c.l.b16 %v63
    %v219 = vunpack.c.l.b16 %v64
    %v220 = vunpack.c.l.b16 %v65
    %v221 = vpack.c.b16 %v206, %v205
    %v222 = vpack.c.b16 %v208, %v207
    %v223 = vpack.c.b16 %v210, %v209
    %v224 = vpack.c.b16 %v212, %v211
    %v225 = vpack.c.b16 %v214, %v213
    %v226 = vpack.c.b16 %v216, %v215
    %v227 = vpack.c.b16 %v218, %v217
    %v228 = vpack.c.b16 %v220, %v219
    %237 = vmatpush.bf16.msra.mxu0 %v228
    %238 = vmatpush.bf16.msra.mxu0 %v227
    %239 = vmatpush.bf16.msra.mxu0 %v226
    %240 = vmatpush.bf16.msra.mxu0 %v225
    %241 = vmatpush.bf16.msra.mxu0 %v224
    %242 = vmatpush.bf16.msra.mxu0 %v223
    %243 = vmatpush.bf16.msra.mxu0 %v222
    %244 = vmatpush.bf16.msra.mxu0 %v221
    %245 = vmatmul.bf16.gmra.mxu0 %v186
    %v246 = vpop.f32.mrf.mxu0
    %v247 = vadd.f32 %v188, %v246
    %v248 = vpop.f32.mrf.mxu0
    %v249 = vadd.f32 %v188, %v248
    %250 = vmatmul.bf16.gmra.mxu0 %v187
    %v251 = vpop.f32.mrf.mxu0
    %v252 = vadd.f32 %v188, %v251
    %v253 = vpop.f32.mrf.mxu0
    %v254 = vadd.f32 %v188, %v253
    %255 = vdwg.mxu0
    %256 = vst [vmem:[#allocation5] sm:$0xff] %v247
    %257 = vst [vmem:[#allocation5 + $0x8] sm:$0xff] %v249
    %258 = vst [vmem:[#allocation5 + $0x10] sm:$0xff] %v252
    %259 = vst [vmem:[#allocation5 + $0x18] sm:$0xff] %v254
    // Predicated region
    $region14: #{net_forward.1} parent=1 // pred_check
      _
    $region15: #{net_forward.1} parent=1 // pred_check_branch
      %261 = sbr.rel (0) target = $region17
    $region16: #{net_forward.1} parent=1 // pred_region
      %263 = vsyncadd [#allocation4], 0
      %s264 = sshll.u32 [#allocation5], 4
      %s265 = int_to_ptr.vmem [resolvable:$true] %s264
      %s266 = sshll.u32 %s2, 4
      %s267 = int_to_ptr.hbm [resolvable:$true] %s266
      %272 = dma.vmem_to_hbm [thread:$0]  %s265, 512, %s267, [#allocation4], 128, 128, 8
    $region17: #{net_forward.1} parent=1 // pred_fallthru
      _
    // Predicated region
    $region18: #{net_forward.1} parent=1 // pred_check
      _
    $region19: #{net_forward.1} parent=1 // pred_check_branch
      %274 = sbr.rel (0) target = $region21
    $region20: #{net_forward.1} parent=1 // pred_region
      %276 = dma.done [#allocation4], 512
    $region21: #{net_forward.1} parent=1 // pred_fallthru
      _
    %277 = vsyncpa [#allocation3], 1
    %278 = vsyncpa [#allocation4], 1

</llo_original>
